<compile_context>
chip_gen: v7x
topology: tpu7x:2x2x1
jax: 0.10.0
libtpu: 0.0.40
codegen_flags: <defaults>
</compile_context>

<pallas_src>
import functools

import jax
import jax.numpy as jnp
from jax.experimental import pallas as pl
from jax.experimental.pallas import tpu as pltpu

CLASSES = 18
EPSILON = 1e-7


def _partials_kernel(logits_ref, labels_ref,
                     tp_out, ps_out, cnt_out, ce_out,
                     tp_acc, ps_acc, cnt_acc, ce_acc):
    j = pl.program_id(1)

    @pl.when(j == 0)
    def _init():
        tp_acc[...] = jnp.zeros_like(tp_acc)
        ps_acc[...] = jnp.zeros_like(ps_acc)
        cnt_acc[...] = jnp.zeros_like(cnt_acc)
        ce_acc[...] = jnp.zeros_like(ce_acc)

    logits = logits_ref[...]            # (C, T) f32, classes on sublanes
    labels = labels_ref[...]            # (1, T) i32, batch on lanes (-1 on pad lanes)
    c, t = logits.shape

    # one-hot: sublane class iota vs lane-dense labels; pad lanes (label = -1) -> zero
    class_ids = jax.lax.broadcasted_iota(jnp.int32, (c, t), 0)
    one_hot = (class_ids == labels).astype(jnp.float32)            # (C, T)

    # numerically-stable softmax over the class (sublane) axis
    col_max = jnp.max(logits, axis=0, keepdims=True)               # (1, T)
    shifted = logits - col_max                                     # (C, T)
    exps = jnp.exp(shifted)                                        # (C, T)
    denom = jnp.sum(exps, axis=0, keepdims=True)                   # (1, T), >= 1
    recip = pl.reciprocal(denom, approx=True)                      # EUP slot
    recip = recip * (2.0 - denom * recip)                          # Newton -> f32 acc.
    probs = exps * recip                                           # (C, T)

    # cross entropy per lane: log(denom) - shifted[label]  (pad lanes give log(C))
    ce_tile = jnp.log(denom) - jnp.sum(one_hot * shifted, axis=0, keepdims=True)

    # per-step lane reductions (XLU) into tiny column accumulators: 4 small stores/step
    tp_acc[...] += jnp.sum(one_hot * probs, axis=1, keepdims=True)   # (C, 1)
    ps_acc[...] += jnp.sum(probs, axis=1, keepdims=True)             # (C, 1)
    cnt_acc[...] += jnp.sum(one_hot, axis=1, keepdims=True)          # (C, 1)
    ce_acc[...] += jnp.sum(ce_tile, axis=1, keepdims=True)           # (1, 1)

    @pl.when(j == pl.num_programs(1) - 1)
    def _emit():
        tp_out[0] = tp_acc[...]
        ps_out[0] = ps_acc[...]
        cnt_out[0] = cnt_acc[...]
        ce_out[0] = ce_acc[...]


def custom_loss(y_pred, y_true, *, tile_n=2048, num_splits=2):
    """y_pred: (N, C) float32 logits, y_true: (N,) int labels -> scalar f32."""
    n, c = y_pred.shape
    num_splits = max(1, int(num_splits))
    # lane tile: multiple of 128, no larger than needed for this batch
    tile_n = max(128, (min(tile_n, 128 * pl.cdiv(n, 128)) // 128) * 128)
    tiles_per_split = max(1, pl.cdiv(n, num_splits * tile_n))
    n_pad = num_splits * tiles_per_split * tile_n
    pad = n_pad - n

    # classes on sublanes, batch on lanes (lane-dense layout).  Pad logits with zeros
    # (pad columns softmax to an exactly uniform 1/C, corrected in the epilogue) and
    # labels with -1 (one-hot is zero on pad lanes, so no per-tile mask is needed).
    # TODO(synk): for large N produce logits in (C, N) layout upstream (or DMA row
    # blocks + XLU-transpose in-kernel) so this standalone XLA transpose's extra HBM
    # pass disappears.
    logits_t = jnp.transpose(jnp.pad(y_pred.astype(jnp.float32), ((0, pad), (0, 0))))
    labels = jnp.pad(y_true.astype(jnp.int32), (0, pad),
                     constant_values=-1).reshape(1, n_pad)

    tp_p, ps_p, cnt_p, ce_p = pl.pallas_call(
        _partials_kernel,
        out_shape=(
            jax.ShapeDtypeStruct((num_splits, c, 1), jnp.float32),   # tp partials
            jax.ShapeDtypeStruct((num_splits, c, 1), jnp.float32),   # sum(probs) part.
            jax.ShapeDtypeStruct((num_splits, c, 1), jnp.float32),   # class counts
            jax.ShapeDtypeStruct((num_splits, 1, 1), jnp.float32),   # CE partial sums
        ),
        grid_spec=pltpu.PrefetchScalarGridSpec(
            num_scalar_prefetch=0,
            grid=(num_splits, tiles_per_split),
            in_specs=[
                pl.BlockSpec((c, tile_n), lambda s, j: (0, s * tiles_per_split + j)),
                pl.BlockSpec((1, tile_n), lambda s, j: (0, s * tiles_per_split + j)),
            ],
            out_specs=[
                pl.BlockSpec((1, c, 1), lambda s, j: (s, 0, 0)),
                pl.BlockSpec((1, c, 1), lambda s, j: (s, 0, 0)),
                pl.BlockSpec((1, c, 1), lambda s, j: (s, 0, 0)),
                pl.BlockSpec((1, 1, 1), lambda s, j: (s, 0, 0)),
            ],
            scratch_shapes=[
                pltpu.VMEM((c, 1), jnp.float32),   # tp accumulator
                pltpu.VMEM((c, 1), jnp.float32),   # sum(probs) accumulator
                pltpu.VMEM((c, 1), jnp.float32),   # class-count accumulator
                pltpu.VMEM((1, 1), jnp.float32),   # CE accumulator
            ],
        ),
        compiler_params=pltpu.CompilerParams(
            # batch split "parallel" (dual-TC on v7x), reduction axis "arbitrary"
            dimension_semantics=("parallel", "arbitrary"),
        ),
    )(logits_t, labels)

    # Tiny epilogue over C=18 values: combine per-core partials, subtract the exact
    # pad-column contributions, compute precision/recall/macro-F1 and the loss.
    tp = jnp.sum(tp_p[:, :, 0], axis=0)                      # (C,)
    ps = jnp.sum(ps_p[:, :, 0], axis=0) - pad / c            # pad cols: uniform 1/C
    cnt = jnp.sum(cnt_p[:, :, 0], axis=0)                    # (C,)
    ce_sum = jnp.sum(ce_p) - pad * jnp.log(jnp.float32(c))   # pad cols: CE = log(C)

    ce_loss = ce_sum / n
    fp = ps - tp                                             # sum(probs) - tp
    fn = cnt - tp                                            # class count - tp
    precision = tp / (tp + fp + EPSILON)
    recall = tp / (tp + fn + EPSILON)
    f1 = 2.0 * precision * recall / (precision + recall + EPSILON)
    f1 = jnp.clip(f1, EPSILON, 1.0 - EPSILON)
    f1_loss = 1.0 - jnp.mean(f1)
    return ce_loss * 0.3 + f1_loss * 0.7


def _reference(y_pred, y_true):
    # pure-JAX reference for sanity check
    n, c = y_pred.shape
    one_hot = jax.nn.one_hot(y_true, c, dtype=jnp.float32)
    log_probs = jax.nn.log_softmax(y_pred, axis=1)
    ce = -jnp.mean(jnp.sum(one_hot * log_probs, axis=1))
    probs = jax.nn.softmax(y_pred, axis=1)
    tp = jnp.sum(one_hot * probs, axis=0)
    fp = jnp.sum((1 - one_hot) * probs, axis=0)
    fn = jnp.sum(one_hot * (1 - probs), axis=0)
    precision = tp / (tp + fp + EPSILON)
    recall = tp / (tp + fn + EPSILON)
    f1 = 2 * precision * recall / (precision + recall + EPSILON)
    f1 = jnp.clip(f1, EPSILON, 1 - EPSILON)
    return ce * 0.3 + (1 - jnp.mean(f1)) * 0.7


if __name__ == "__main__":
    key = jax.random.PRNGKey(0)
    k1, k2, k3, k4 = jax.random.split(key, 4)

    loss_fn = jax.jit(custom_loss, static_argnames=("tile_n", "num_splits"))

    # small case (one tile per split, heavily padded -> exercises pad corrections)
    n1 = 8
    yp1 = jax.random.normal(k1, (n1, CLASSES), dtype=jnp.float32)
    yt1 = jax.random.randint(k2, (n1,), 0, CLASSES, dtype=jnp.int32)
    loss1 = loss_fn(yp1, yt1)
    jax.block_until_ready(loss1)
    ref1 = _reference(yp1, yt1)
    # tolerance 1e-4: approx+Newton reciprocal and analytic pad corrections introduce
    # only rounding-level drift, but keep a little slack vs. the pure-XLA reference.
    assert jnp.allclose(loss1, ref1, atol=1e-4, rtol=1e-4), (loss1, ref1)

    # multi-tile case with ragged padding (exercises cross-tile accumulation and the
    # two-way batch split)
    n2 = 300
    yp2 = jax.random.normal(k3, (n2, CLASSES), dtype=jnp.float32)
    yt2 = jax.random.randint(k4, (n2,), 0, CLASSES, dtype=jnp.int32)
    loss2 = loss_fn(yp2, yt2, tile_n=128)
    jax.block_until_ready(loss2)
    ref2 = _reference(yp2, yt2)
    assert jnp.allclose(loss2, ref2, atol=1e-4, rtol=1e-4), (loss2, ref2)

    print("KERNEL_OK")
</pallas_src>

<mosaic_0001>
module attributes {stable_mosaic.version = 11 : i64} {
  func.func @_partials_kernel(%arg0: i32, %arg1: i32, %arg2: memref<18x128xf32, #tpu.memory_space<vmem>>, %arg3: memref<1x128xi32, #tpu.memory_space<vmem>>, %arg4: memref<1x18x1xf32, #tpu.memory_space<vmem>>, %arg5: memref<1x18x1xf32, #tpu.memory_space<vmem>>, %arg6: memref<1x18x1xf32, #tpu.memory_space<vmem>>, %arg7: memref<1x1x1xf32, #tpu.memory_space<vmem>>, %arg8: memref<18x1xf32, #tpu.memory_space<vmem>>, %arg9: memref<18x1xf32, #tpu.memory_space<vmem>>, %arg10: memref<18x1xf32, #tpu.memory_space<vmem>>, %arg11: memref<1x1xf32, #tpu.memory_space<vmem>>) attributes {dimension_semantics = [#tpu.dimension_semantics<parallel>, #tpu.dimension_semantics<arbitrary>], iteration_bounds = array<i64: 2, 1>, scalar_prefetch = 0 : i64, scratch_operands = 4 : i64, tpu.core_type = #tpu.core_type<tc>, window_params = [{transform_indices = @transform_0, window_bounds = array<i64: 18, 128>}, {transform_indices = @transform_1, window_bounds = array<i64: 1, 128>}, {transform_indices = @transform_2, window_bounds = array<i64: 1, 18, 1>}, {transform_indices = @transform_3, window_bounds = array<i64: 1, 18, 1>}, {transform_indices = @transform_4, window_bounds = array<i64: 1, 18, 1>}, {transform_indices = @transform_5, window_bounds = array<i64: 1, 1, 1>}]} {
    %c0_i32 = arith.constant 0 : i32
    %0 = arith.cmpi eq, %arg1, %c0_i32 : i32
    %1 = arith.extui %0 : i1 to i32
    %c0_i32_0 = arith.constant 0 : i32
    %2 = arith.cmpi ne, %1, %c0_i32_0 : i32
    scf.if %2 {
      %cst_29 = arith.constant 0.000000e+00 : f32
      %53 = vector.broadcast %cst_29 : f32 to vector<18x1xf32>
      %c0_30 = arith.constant 0 : index
      %c0_31 = arith.constant 0 : index
      %54 = vector.load %arg8[%c0_30, %c0_31] : memref<18x1xf32, #tpu.memory_space<vmem>>, vector<18x1xf32>
      tpu.vector_store %arg8[%c0_30, %c0_31], %53 {strides = array<i32>} : memref<18x1xf32, #tpu.memory_space<vmem>>, vector<18x1xf32>,
      %cst_32 = arith.constant 0.000000e+00 : f32
      %55 = vector.broadcast %cst_32 : f32 to vector<18x1xf32>
      %c0_33 = arith.constant 0 : index
      %c0_34 = arith.constant 0 : index
      %56 = vector.load %arg9[%c0_33, %c0_34] : memref<18x1xf32, #tpu.memory_space<vmem>>, vector<18x1xf32>
      tpu.vector_store %arg9[%c0_33, %c0_34], %55 {strides = array<i32>} : memref<18x1xf32, #tpu.memory_space<vmem>>, vector<18x1xf32>,
      %cst_35 = arith.constant 0.000000e+00 : f32
      %57 = vector.broadcast %cst_35 : f32 to vector<18x1xf32>
      %c0_36 = arith.constant 0 : index
      %c0_37 = arith.constant 0 : index
      %58 = vector.load %arg10[%c0_36, %c0_37] : memref<18x1xf32, #tpu.memory_space<vmem>>, vector<18x1xf32>
      tpu.vector_store %arg10[%c0_36, %c0_37], %57 {strides = array<i32>} : memref<18x1xf32, #tpu.memory_space<vmem>>, vector<18x1xf32>,
      %cst_38 = arith.constant 0.000000e+00 : f32
      %59 = vector.broadcast %cst_38 : f32 to vector<1x1xf32>
      %c0_39 = arith.constant 0 : index
      %c0_40 = arith.constant 0 : index
      %60 = vector.load %arg11[%c0_39, %c0_40] : memref<1x1xf32, #tpu.memory_space<vmem>>, vector<1x1xf32>
      tpu.vector_store %arg11[%c0_39, %c0_40], %59 {strides = array<i32>} : memref<1x1xf32, #tpu.memory_space<vmem>>, vector<1x1xf32>,
    } else {
    }
    %c0 = arith.constant 0 : index
    %c0_1 = arith.constant 0 : index
    %3 = vector.load %arg2[%c0, %c0_1] : memref<18x128xf32, #tpu.memory_space<vmem>>, vector<18x128xf32>
    %c0_2 = arith.constant 0 : index
    %c0_3 = arith.constant 0 : index
    %4 = vector.load %arg3[%c0_2, %c0_3] : memref<1x128xi32, #tpu.memory_space<vmem>>, vector<1x128xi32>
    %5 = tpu.iota {dimensions = array<i32: 0>} : vector<18x128xi32>
    %6 = vector.broadcast %4 : vector<1x128xi32> to vector<18x128xi32>
    %7 = arith.cmpi eq, %5, %6 : vector<18x128xi32>
    %8 = arith.extui %7 : vector<18x128xi1> to vector<18x128xi32>
    %9 = arith.sitofp %8 : vector<18x128xi32> to vector<18x128xf32>
    %cst = arith.constant dense<0xFF800000> : vector<128xf32>
    %10 = vector.multi_reduction <maximumf>, %3, %cst [0] : vector<18x128xf32> to vector<128xf32>
    %11 = vector.shape_cast %10 : vector<128xf32> to vector<1x128xf32>
    %12 = vector.broadcast %11 : vector<1x128xf32> to vector<18x128xf32>
    %13 = arith.subf %3, %12 : vector<18x128xf32>
    %14 = math.exp %13 : vector<18x128xf32>
    %cst_4 = arith.constant dense<0.000000e+00> : vector<128xf32>
    %15 = vector.multi_reduction <add>, %14, %cst_4 [0] : vector<18x128xf32> to vector<128xf32>
    %16 = vector.shape_cast %15 : vector<128xf32> to vector<1x128xf32>
    %17 = tpu.reciprocal %16 {approx = true} : vector<1x128xf32> -> vector<1x128xf32>
    %18 = arith.mulf %16, %17 : vector<1x128xf32>
    %cst_5 = arith.constant 2.000000e+00 : f32
    %19 = vector.broadcast %cst_5 : f32 to vector<1x128xf32>
    %20 = arith.subf %19, %18 : vector<1x128xf32>
    %21 = arith.mulf %17, %20 : vector<1x128xf32>
    %22 = vector.broadcast %21 : vector<1x128xf32> to vector<18x128xf32>
    %23 = arith.mulf %14, %22 : vector<18x128xf32>
    %24 = math.log %16 : vector<1x128xf32>
    %25 = arith.mulf %9, %13 : vector<18x128xf32>
    %cst_6 = arith.constant dense<0.000000e+00> : vector<128xf32>
    %26 = vector.multi_reduction <add>, %25, %cst_6 [0] : vector<18x128xf32> to vector<128xf32>
    %27 = vector.shape_cast %26 : vector<128xf32> to vector<1x128xf32>
    %28 = arith.subf %24, %27 : vector<1x128xf32>
    %c0_7 = arith.constant 0 : index
    %c0_8 = arith.constant 0 : index
    %29 = vector.load %arg8[%c0_7, %c0_8] : memref<18x1xf32, #tpu.memory_space<vmem>>, vector<18x1xf32>
    %30 = arith.mulf %9, %23 : vector<18x128xf32>
    %cst_9 = arith.constant dense<0.000000e+00> : vector<18xf32>
    %31 = vector.multi_reduction <add>, %30, %cst_9 [1] : vector<18x128xf32> to vector<18xf32>
    %32 = vector.shape_cast %31 : vector<18xf32> to vector<18x1xf32>
    %33 = arith.addf %29, %32 : vector<18x1xf32>
    %c0_10 = arith.constant 0 : index
    %c0_11 = arith.constant 0 : index
    %34 = vector.load %arg8[%c0_10, %c0_11] : memref<18x1xf32, #tpu.memory_space<vmem>>, vector<18x1xf32>
    tpu.vector_store %arg8[%c0_10, %c0_11], %33 {strides = array<i32>} : memref<18x1xf32, #tpu.memory_space<vmem>>, vector<18x1xf32>,
    %c0_12 = arith.constant 0 : index
    %c0_13 = arith.constant 0 : index
    %35 = vector.load %arg9[%c0_12, %c0_13] : memref<18x1xf32, #tpu.memory_space<vmem>>, vector<18x1xf32>
    %cst_14 = arith.constant dense<0.000000e+00> : vector<18xf32>
    %36 = vector.multi_reduction <add>, %23, %cst_14 [1] : vector<18x128xf32> to vector<18xf32>
    %37 = vector.shape_cast %36 : vector<18xf32> to vector<18x1xf32>
    %38 = arith.addf %35, %37 : vector<18x1xf32>
    %c0_15 = arith.constant 0 : index
    %c0_16 = arith.constant 0 : index
    %39 = vector.load %arg9[%c0_15, %c0_16] : memref<18x1xf32, #tpu.memory_space<vmem>>, vector<18x1xf32>
    tpu.vector_store %arg9[%c0_15, %c0_16], %38 {strides = array<i32>} : memref<18x1xf32, #tpu.memory_space<vmem>>, vector<18x1xf32>,
    %c0_17 = arith.constant 0 : index
    %c0_18 = arith.constant 0 : index
    %40 = vector.load %arg10[%c0_17, %c0_18] : memref<18x1xf32, #tpu.memory_space<vmem>>, vector<18x1xf32>
    %cst_19 = arith.constant dense<0.000000e+00> : vector<18xf32>
    %41 = vector.multi_reduction <add>, %9, %cst_19 [1] : vector<18x128xf32> to vector<18xf32>
    %42 = vector.shape_cast %41 : vector<18xf32> to vector<18x1xf32>
    %43 = arith.addf %40, %42 : vector<18x1xf32>
    %c0_20 = arith.constant 0 : index
    %c0_21 = arith.constant 0 : index
    %44 = vector.load %arg10[%c0_20, %c0_21] : memref<18x1xf32, #tpu.memory_space<vmem>>, vector<18x1xf32>
    tpu.vector_store %arg10[%c0_20, %c0_21], %43 {strides = array<i32>} : memref<18x1xf32, #tpu.memory_space<vmem>>, vector<18x1xf32>,
    %c0_22 = arith.constant 0 : index
    %c0_23 = arith.constant 0 : index
    %45 = vector.load %arg11[%c0_22, %c0_23] : memref<1x1xf32, #tpu.memory_space<vmem>>, vector<1x1xf32>
    %cst_24 = arith.constant dense<0.000000e+00> : vector<1xf32>
    %46 = vector.multi_reduction <add>, %28, %cst_24 [1] : vector<1x128xf32> to vector<1xf32>
    %47 = vector.shape_cast %46 : vector<1xf32> to vector<1x1xf32>
    %48 = arith.addf %45, %47 : vector<1x1xf32>
    %c0_25 = arith.constant 0 : index
    %c0_26 = arith.constant 0 : index
    %49 = vector.load %arg11[%c0_25, %c0_26] : memref<1x1xf32, #tpu.memory_space<vmem>>, vector<1x1xf32>
    tpu.vector_store %arg11[%c0_25, %c0_26], %48 {strides = array<i32>} : memref<1x1xf32, #tpu.memory_space<vmem>>, vector<1x1xf32>,
    %c0_i32_27 = arith.constant 0 : i32
    %50 = arith.cmpi eq, %arg1, %c0_i32_27 : i32
    %51 = arith.extui %50 : i1 to i32
    %c0_i32_28 = arith.constant 0 : i32
    %52 = arith.cmpi ne, %51, %c0_i32_28 : i32
    scf.if %52 {
      %c0_29 = arith.constant 0 : index
      %c0_30 = arith.constant 0 : index
      %53 = vector.load %arg8[%c0_29, %c0_30] : memref<18x1xf32, #tpu.memory_space<vmem>>, vector<18x1xf32>
      %c0_31 = arith.constant 0 : index
      %c0_32 = arith.constant 0 : index
      %c0_33 = arith.constant 0 : index
      %54 = vector.load %arg4[%c0_31, %c0_32, %c0_33] : memref<1x18x1xf32, #tpu.memory_space<vmem>>, vector<1x18x1xf32>
      %55 = vector.shape_cast %54 : vector<1x18x1xf32> to vector<18x1xf32>
      %56 = vector.shape_cast %53 : vector<18x1xf32> to vector<1x18x1xf32>
      tpu.vector_store %arg4[%c0_31, %c0_32, %c0_33], %56 {strides = array<i32>} : memref<1x18x1xf32, #tpu.memory_space<vmem>>, vector<1x18x1xf32>,
      %c0_34 = arith.constant 0 : index
      %c0_35 = arith.constant 0 : index
      %57 = vector.load %arg9[%c0_34, %c0_35] : memref<18x1xf32, #tpu.memory_space<vmem>>, vector<18x1xf32>
      %c0_36 = arith.constant 0 : index
      %c0_37 = arith.constant 0 : index
      %c0_38 = arith.constant 0 : index
      %58 = vector.load %arg5[%c0_36, %c0_37, %c0_38] : memref<1x18x1xf32, #tpu.memory_space<vmem>>, vector<1x18x1xf32>
      %59 = vector.shape_cast %58 : vector<1x18x1xf32> to vector<18x1xf32>
      %60 = vector.shape_cast %57 : vector<18x1xf32> to vector<1x18x1xf32>
      tpu.vector_store %arg5[%c0_36, %c0_37, %c0_38], %60 {strides = array<i32>} : memref<1x18x1xf32, #tpu.memory_space<vmem>>, vector<1x18x1xf32>,
      %c0_39 = arith.constant 0 : index
      %c0_40 = arith.constant 0 : index
      %61 = vector.load %arg10[%c0_39, %c0_40] : memref<18x1xf32, #tpu.memory_space<vmem>>, vector<18x1xf32>
      %c0_41 = arith.constant 0 : index
      %c0_42 = arith.constant 0 : index
      %c0_43 = arith.constant 0 : index
      %62 = vector.load %arg6[%c0_41, %c0_42, %c0_43] : memref<1x18x1xf32, #tpu.memory_space<vmem>>, vector<1x18x1xf32>
      %63 = vector.shape_cast %62 : vector<1x18x1xf32> to vector<18x1xf32>
      %64 = vector.shape_cast %61 : vector<18x1xf32> to vector<1x18x1xf32>
      tpu.vector_store %arg6[%c0_41, %c0_42, %c0_43], %64 {strides = array<i32>} : memref<1x18x1xf32, #tpu.memory_space<vmem>>, vector<1x18x1xf32>,
      %c0_44 = arith.constant 0 : index
      %c0_45 = arith.constant 0 : index
      %65 = vector.load %arg11[%c0_44, %c0_45] : memref<1x1xf32, #tpu.memory_space<vmem>>, vector<1x1xf32>
      %c0_46 = arith.constant 0 : index
      %c0_47 = arith.constant 0 : index
      %c0_48 = arith.constant 0 : index
      %66 = vector.load %arg7[%c0_46, %c0_47, %c0_48] : memref<1x1x1xf32, #tpu.memory_space<vmem>>, vector<1x1x1xf32>
      %67 = vector.shape_cast %66 : vector<1x1x1xf32> to vector<1x1xf32>
      %68 = vector.shape_cast %65 : vector<1x1xf32> to vector<1x1x1xf32>
      tpu.vector_store %arg7[%c0_46, %c0_47, %c0_48], %68 {strides = array<i32>} : memref<1x1x1xf32, #tpu.memory_space<vmem>>, vector<1x1x1xf32>,
    } else {
    }
    return
  }
  func.func @transform_0(%arg0: i32, %arg1: i32) -> (i32, i32) {
    %c1_i32 = arith.constant 1 : i32
    %0 = arith.muli %arg0, %c1_i32 : i32
    %1 = arith.addi %0, %arg1 : i32
    %c0_i32 = arith.constant 0 : i32
    %c0_i32_0 = arith.constant 0 : i32
    return %c0_i32, %1 : i32, i32
  }
  func.func @transform_1(%arg0: i32, %arg1: i32) -> (i32, i32) {
    %c1_i32 = arith.constant 1 : i32
    %0 = arith.muli %arg0, %c1_i32 : i32
    %1 = arith.addi %0, %arg1 : i32
    %c0_i32 = arith.constant 0 : i32
    %c0_i32_0 = arith.constant 0 : i32
    return %c0_i32, %1 : i32, i32
  }
  func.func @transform_2(%arg0: i32, %arg1: i32) -> (i32, i32, i32) {
    %c0_i32 = arith.constant 0 : i32
    %c0_i32_0 = arith.constant 0 : i32
    %c0_i32_1 = arith.constant 0 : i32
    return %arg0, %c0_i32, %c0_i32_0 : i32, i32, i32
  }
  func.func @transform_3(%arg0: i32, %arg1: i32) -> (i32, i32, i32) {
    %c0_i32 = arith.constant 0 : i32
    %c0_i32_0 = arith.constant 0 : i32
    %c0_i32_1 = arith.constant 0 : i32
    return %arg0, %c0_i32, %c0_i32_0 : i32, i32, i32
  }
  func.func @transform_4(%arg0: i32, %arg1: i32) -> (i32, i32, i32) {
    %c0_i32 = arith.constant 0 : i32
    %c0_i32_0 = arith.constant 0 : i32
    %c0_i32_1 = arith.constant 0 : i32
    return %arg0, %c0_i32, %c0_i32_0 : i32, i32, i32
  }
  func.func @transform_5(%arg0: i32, %arg1: i32) -> (i32, i32, i32) {
    %c0_i32 = arith.constant 0 : i32
    %c0_i32_0 = arith.constant 0 : i32
    %c0_i32_1 = arith.constant 0 : i32
    return %arg0, %c0_i32, %c0_i32_0 : i32, i32, i32
  }
}

</mosaic_0001>

<llo_original>
// kernel: custom_loss.1
$region0: #{custom_loss.1}
  #allocation0 [shape = 'u32[]', space=smem, size = 0x4, offset = 0x4, fixed_abs, tag = 'smem constant byte address 0x4 - core index']
  #allocation1 [shape = 'u32[144,128]{1,0:T(1,128)}', space=vmem, size = 0x12000, scoped, tag = 'internal scratch']
  #allocation2 [shape = 'f32[18,1]{1,0:T(8,128)}', space=vmem, size = 0x3000, scoped, tag = 'scratch operand']
  #allocation3 [shape = 'f32[18,1]{1,0:T(8,128)}', space=vmem, size = 0x3000, scoped, tag = 'scratch operand']
  #allocation4 [shape = 'f32[18,1]{1,0:T(8,128)}', space=vmem, size = 0x3000, scoped, tag = 'scratch operand']
  #allocation5 [shape = 'f32[1,1]{1,0:T(1,128)}', space=vmem, size = 0x200, scoped, tag = 'scratch operand']
  %s0 = inlined_call_operand.vmem [shape: f32[18,256], index: 0, kind: input, shape index: {}]
  %s1 = inlined_call_operand.vmem [shape: s32[1,256], index: 1, kind: input, shape index: {}]
  %s2 = inlined_call_operand.vmem [shape: f32[2,18,1], index: 2, kind: output, shape index: {0}]
  %s3 = inlined_call_operand.vmem [shape: f32[2,18,1], index: 3, kind: output, shape index: {1}]
  %s4 = inlined_call_operand.vmem [shape: f32[2,18,1], index: 4, kind: output, shape index: {2}]
  %s5 = inlined_call_operand.vmem [shape: f32[2,1,1], index: 5, kind: output, shape index: {3}]
  %6 = xla_tuple %s2, %s3, %s4, %s5
  %s7 = sld [smem:[#allocation0]]
  $region111: #{custom_loss.1} parent=0
    _
  %s9 = ssub.s32 1, %s7
  %s10 = scalar_select 0, %s9, %s7
  $region1: #{custom_loss.1} parent=0
    #allocation6 [shape = 'u8[24576]{0}', space=vmem, size = 0x6000, scoped, tag = 'input window, operand 0']
    loop: start=0, step=1, limit=4
    $region2: #{custom_loss.1} parent=1 // loop_pre_header
      _
    $region3: #{custom_loss.1} parent=1 // loop_header
      %s12 = sphi 0, %s16
      %p13 = scmp.ge.s32.totalorder %s12, 4
      %s19 = sphi 0, %s31
      %s20 = sphi 0, %s27
      %s21 = sphi 0, %s19
      %s22 = sphi 0, %s20
      %s23 = sphi 0, %s21
      %s24 = sphi 0, %s22
      %s36 = sphi 0, %s38
      %s39 = sphi 0, %s36
      %s40 = sphi 0, %s39
      %s56 = sphi 0, %s40
      %s64 = sphi 0, %s66
      %s67 = sphi 0, %s64
      %s68 = sphi 0, %s67
      %s84 = sphi 0, %s68
      %s90 = sphi 0, %s92
      %s93 = sphi 0, %s90
      %s94 = sphi 0, %s93
      %s110 = sphi 0, %s94
      %s116 = sphi 0, %s118
      %s119 = sphi 0, %s116
      %s120 = sphi 0, %s119
      %s136 = sphi 0, %s120
      %s142 = sphi 0, %s144
      %s145 = sphi 0, %s142
      %s146 = sphi 0, %s145
      %s162 = sphi 0, %s146
      %s168 = sphi 0, %s170
      %s171 = sphi 0, %s168
      %s172 = sphi 0, %s171
      %s188 = sphi 0, %s172
    $region4: #{custom_loss.1} parent=1 // loop_header_branch
      %15 = sbr.rel (%p13) target = $region8
    $region5: #{custom_loss.1} parent=1 // loop_body
      %s17 = ssub.s32 %s12, 1
      %s18 = ssub.s32 %s12, 2
      %s25 = sadd.s32 1, %s20
      %p26 = scmp.ge.s32.totalorder %s25, 1
      %s27 = scalar_select %p26, 0, %s25
      %s28 = sadd.s32 1, %s19
      %s29 = scalar_select %p26, %s28, %s19
      %p30 = scmp.ge.s32.totalorder %s29, 2
      %s31 = scalar_select %p30, 0, %s29
      %s32 = sadd.s32 %s19, %s20
      %s33 = sadd.s32 %s31, %s27
      %s34 = ssub.s32 %s32, %s33
      %p35 = scmp.eq.s32.totalorder %s34, 0
      %s37 = sadd.s32 %s36, 1
      %s38 = scalar_select %p35, %s36, %s37
      %p41 = pneg %p35
      %p42 = scmp.eq.s32.totalorder %s12, 1
      %p43 = por %p41, %p42
      %p44 = scmp.ne.s32.totalorder %s36, %s39
      %p45 = scmp.eq.s32.totalorder %s12, 0
      %p46 = por %p44, %p45
      %p47 = scmp.ne.s32.totalorder %s36, %s39
      %p48 = scmp.eq.s32.totalorder %s17, 1
      %p49 = por %p47, %p48
      %p50 = scmp.ne.s32.totalorder %s39, %s40
      %p51 = scmp.eq.s32.totalorder %s17, 0
      %p52 = por %p50, %p51
      %p53 = scmp.ne.s32.totalorder %s39, %s40
      %p54 = scmp.eq.s32.totalorder %s18, 1
      %p55 = por %p53, %p54
      %p57 = scmp.ne.s32.totalorder %s40, %s56
      %p58 = scmp.eq.s32.totalorder %s18, 0
      %p59 = por %p57, %p58
      %s60 = sadd.s32 %s19, %s20
      %s61 = sadd.s32 %s31, %s27
      %s62 = ssub.s32 %s60, %s61
      %p63 = scmp.eq.s32.totalorder %s62, 0
      %s65 = sadd.s32 %s64, 1
      %s66 = scalar_select %p63, %s64, %s65
      %p69 = pneg %p63
      %p70 = scmp.eq.s32.totalorder %s12, 1
      %p71 = por %p69, %p70
      %p72 = scmp.ne.s32.totalorder %s64, %s67
      %p73 = scmp.eq.s32.totalorder %s12, 0
      %p74 = por %p72, %p73
      %p75 = scmp.ne.s32.totalorder %s64, %s67
      %p76 = scmp.eq.s32.totalorder %s17, 1
      %p77 = por %p75, %p76
      %p78 = scmp.ne.s32.totalorder %s67, %s68
      %p79 = scmp.eq.s32.totalorder %s17, 0
      %p80 = por %p78, %p79
      %p81 = scmp.ne.s32.totalorder %s67, %s68
      %p82 = scmp.eq.s32.totalorder %s18, 1
      %p83 = por %p81, %p82
      %p85 = scmp.ne.s32.totalorder %s68, %s84
      %p86 = scmp.eq.s32.totalorder %s18, 0
      %p87 = por %p85, %p86
      %s88 = ssub.s32 %s19, %s31
      %p89 = scmp.eq.s32.totalorder %s88, 0
      %s91 = sadd.s32 %s90, 1
      %s92 = scalar_select %p89, %s90, %s91
      %p95 = pneg %p89
      %p96 = scmp.eq.s32.totalorder %s12, 1
      %p97 = por %p95, %p96
      %p98 = scmp.ne.s32.totalorder %s90, %s93
      %p99 = scmp.eq.s32.totalorder %s12, 0
      %p100 = por %p98, %p99
      %p101 = scmp.ne.s32.totalorder %s90, %s93
      %p102 = scmp.eq.s32.totalorder %s17, 1
      %p103 = por %p101, %p102
      %p104 = scmp.ne.s32.totalorder %s93, %s94
      %p105 = scmp.eq.s32.totalorder %s17, 0
      %p106 = por %p104, %p105
      %p107 = scmp.ne.s32.totalorder %s93, %s94
      %p108 = scmp.eq.s32.totalorder %s18, 1
      %p109 = por %p107, %p108
      %p111 = scmp.ne.s32.totalorder %s94, %s110
      %p112 = scmp.eq.s32.totalorder %s18, 0
      %p113 = por %p111, %p112
      %s114 = ssub.s32 %s19, %s31
      %p115 = scmp.eq.s32.totalorder %s114, 0
      %s117 = sadd.s32 %s116, 1
      %s118 = scalar_select %p115, %s116, %s117
      %p121 = pneg %p115
      %p122 = scmp.eq.s32.totalorder %s12, 1
      %p123 = por %p121, %p122
      %p124 = scmp.ne.s32.totalorder %s116, %s119
      %p125 = scmp.eq.s32.totalorder %s12, 0
      %p126 = por %p124, %p125
      %p127 = scmp.ne.s32.totalorder %s116, %s119
      %p128 = scmp.eq.s32.totalorder %s17, 1
      %p129 = por %p127, %p128
      %p130 = scmp.ne.s32.totalorder %s119, %s120
      %p131 = scmp.eq.s32.totalorder %s17, 0
      %p132 = por %p130, %p131
      %p133 = scmp.ne.s32.totalorder %s119, %s120
      %p134 = scmp.eq.s32.totalorder %s18, 1
      %p135 = por %p133, %p134
      %p137 = scmp.ne.s32.totalorder %s120, %s136
      %p138 = scmp.eq.s32.totalorder %s18, 0
      %p139 = por %p137, %p138
      %s140 = ssub.s32 %s19, %s31
      %p141 = scmp.eq.s32.totalorder %s140, 0
      %s143 = sadd.s32 %s142, 1
      %s144 = scalar_select %p141, %s142, %s143
      %p147 = pneg %p141
      %p148 = scmp.eq.s32.totalorder %s12, 1
      %p149 = por %p147, %p148
      %p150 = scmp.ne.s32.totalorder %s142, %s145
      %p151 = scmp.eq.s32.totalorder %s12, 0
      %p152 = por %p150, %p151
      %p153 = scmp.ne.s32.totalorder %s142, %s145
      %p154 = scmp.eq.s32.totalorder %s17, 1
      %p155 = por %p153, %p154
      %p156 = scmp.ne.s32.totalorder %s145, %s146
      %p157 = scmp.eq.s32.totalorder %s17, 0
      %p158 = por %p156, %p157
      %p159 = scmp.ne.s32.totalorder %s145, %s146
      %p160 = scmp.eq.s32.totalorder %s18, 1
      %p161 = por %p159, %p160
      %p163 = scmp.ne.s32.totalorder %s146, %s162
      %p164 = scmp.eq.s32.totalorder %s18, 0
      %p165 = por %p163, %p164
      %s166 = ssub.s32 %s19, %s31
      %p167 = scmp.eq.s32.totalorder %s166, 0
      %s169 = sadd.s32 %s168, 1
      %s170 = scalar_select %p167, %s168, %s169
      %p173 = pneg %p167
      %p174 = scmp.eq.s32.totalorder %s12, 1
      %p175 = por %p173, %p174
      %p176 = scmp.ne.s32.totalorder %s168, %s171
      %p177 = scmp.eq.s32.totalorder %s12, 0
      %p178 = por %p176, %p177
      %p179 = scmp.ne.s32.totalorder %s168, %s171
      %p180 = scmp.eq.s32.totalorder %s17, 1
      %p181 = por %p179, %p180
      %p182 = scmp.ne.s32.totalorder %s171, %s172
      %p183 = scmp.eq.s32.totalorder %s17, 0
      %p184 = por %p182, %p183
      %p185 = scmp.ne.s32.totalorder %s171, %s172
      %p186 = scmp.eq.s32.totalorder %s18, 1
      %p187 = por %p185, %p186
      %p189 = scmp.ne.s32.totalorder %s172, %s188
      %p190 = scmp.eq.s32.totalorder %s18, 0
      %p191 = por %p189, %p190
      %p192 = scmp.le.s32.totalorder 1, %s12
      %p193 = scmp.lt.s32.totalorder %s12, 3
      %p194 = pnand %p192, %p193
      %p195 = pneg %p194
      // Predicated region
      $region9: #{custom_loss.1} parent=5 // pred_check
        _
      $region10: #{custom_loss.1} parent=5 // pred_check_branch
        %197 = sbr.rel (%p194) target = $region12
      $region11: #{custom_loss.1} parent=5 // pred_region
        %s198 = ssub.s32 %s12, 1
      $region12: #{custom_loss.1} parent=5 // pred_fallthru
        _
      %p199 = scmp.lt.s32.totalorder %s12, 2
      // Predicated region
      $region13: #{custom_loss.1} parent=5 // pred_check
        %p200 = pneg %p199
      $region14: #{custom_loss.1} parent=5 // pred_check_branch
        %202 = sbr.rel (%p200) target = $region16
      $region15: #{custom_loss.1} parent=5 // pred_region
        // Predicated region
        $region17: #{custom_loss.1} parent=15 // pred_check
          %p203 = pneg %p46
        $region18: #{custom_loss.1} parent=15 // pred_check_branch
          %205 = sbr.rel (%p203) target = $region20
        $region19: #{custom_loss.1} parent=15 // pred_region
          %s206 = sand.u32 %s36, 1
          %s207 = sand.u32 %s36, 1
          %s208 = smul.addr %s207, 24
          %s209 = scalar_lea.vmem [#allocation6], %s208
          %s210 = sadd.s32 %s19, %s20
          %s211 = smul.addr %s210, 8
          %s212 = scalar_lea.vmem %s0, %s211
          // Predicated region
          $region21: #{custom_loss.1} parent=19 // pred_check
            _
          $region22: #{custom_loss.1} parent=19 // pred_check_branch
            %214 = sbr.rel (0) target = $region24
          $region23: #{custom_loss.1} parent=19 // pred_region
            // Predicated region
            $region25: #{custom_loss.1} parent=23 // pred_check
              _
            $region26: #{custom_loss.1} parent=23 // pred_check_branch
              %216 = sbr.rel (0) target = $region28
            $region27: #{custom_loss.1} parent=23 // pred_region
              // Predicated region
              $region40: #{custom_loss.1} parent=27 // pred_check
                _
              $region41: #{custom_loss.1} parent=27 // pred_check_branch
                %235 = sbr.rel (0) target = $region43
              $region42: #{custom_loss.1} parent=27 // pred_region
                loop: start=0, step=1, limit=1
                $region44: #{custom_loss.1} parent=42 // loop_pre_header
                  _
                $region45: #{custom_loss.1} parent=42 // loop_header
                  %s237 = sphi 0, %s241
                  %p238 = scmp.ge.s32.totalorder %s237, 1
                  %s242 = sphi %s212, %s212
                  %s243 = sphi %s209, %s209
                $region46: #{custom_loss.1} parent=42 // loop_header_branch
                  %240 = sbr.rel (%p238) target = $region50
                $region47: #{custom_loss.1} parent=42 // loop_body
                  %v244 = vld [vmem:[%s242] sm:$0xff]
                  %245 = vst [vmem:[%s243] sm:$0xff] %v244
                  %v246 = vld [vmem:[%s242 + $0x10] sm:$0xff]
                  %247 = vst [vmem:[%s243 + $0x8] sm:$0xff] %v246
                  %v248 = vld [vmem:[%s242 + $0x20] sm:$0xff]
                  %249 = vst [vmem:[%s243 + $0x10] sm:$0xff] %v248
                $region48: #{custom_loss.1} parent=42 // loop_footer
                  %s241 = sadd.s32 1, %s237
                $region49: #{custom_loss.1} parent=42 // loop_footer_branch
                  %236 = sbr.rel target = $region45
                $region50: #{custom_loss.1} parent=42 // loop_exit
                  _
              $region43: #{custom_loss.1} parent=27 // pred_fallthru
                _
              // Predicated region
              $region51: #{custom_loss.1} parent=27 // pred_check
                _
              $region52: #{custom_loss.1} parent=27 // pred_check_branch
                %251 = sbr.rel target = $region54
              $region53: #{custom_loss.1} parent=27 // pred_region
                _
              $region54: #{custom_loss.1} parent=27 // pred_fallthru
                _
            $region28: #{custom_loss.1} parent=23 // pred_fallthru
              _
            // Predicated region
            $region29: #{custom_loss.1} parent=23 // pred_check
              _
            $region30: #{custom_loss.1} parent=23 // pred_check_branch
              %218 = sbr.rel target = $region32
            $region31: #{custom_loss.1} parent=23 // pred_region
              loop: start=0, step=1, limit=1
              $region33: #{custom_loss.1} parent=31 // loop_pre_header
                _
              $region34: #{custom_loss.1} parent=31 // loop_header
                %s221 = sphi 0, %s225
                %p222 = scmp.ge.s32.totalorder %s221, 1
                %s226 = sphi %s212, %s212
                %s227 = sphi %s209, %s209
              $region35: #{custom_loss.1} parent=31 // loop_header_branch
                %224 = sbr.rel (%p222) target = $region39
              $region36: #{custom_loss.1} parent=31 // loop_body
                %v228 = vld [vmem:[%s226] sm:$0xff]
                %229 = vst [vmem:[%s227] sm:$0xff] %v228
                %v230 = vld [vmem:[%s226 + $0x10] sm:$0xff]
                %231 = vst [vmem:[%s227 + $0x8] sm:$0xff] %v230
                %v232 = vld [vmem:[%s226 + $0x20] sm:$0xff]
                %233 = vst [vmem:[%s227 + $0x10] sm:$0xff] %v232
              $region37: #{custom_loss.1} parent=31 // loop_footer
                %s225 = sadd.s32 1, %s221
              $region38: #{custom_loss.1} parent=31 // loop_footer_branch
                %220 = sbr.rel target = $region34
              $region39: #{custom_loss.1} parent=31 // loop_exit
                _
            $region32: #{custom_loss.1} parent=23 // pred_fallthru
              _
          $region24: #{custom_loss.1} parent=19 // pred_fallthru
            _
          %252 = vnop
        $region20: #{custom_loss.1} parent=15 // pred_fallthru
          _
        // Predicated region
        $region55: #{custom_loss.1} parent=15 // pred_check
          %p253 = pneg %p74
        $region56: #{custom_loss.1} parent=15 // pred_check_branch
          %255 = sbr.rel (%p253) target = $region58
        $region57: #{custom_loss.1} parent=15 // pred_region
          %s256 = sadd.s32 %s19, %s20
          %p257 = scmp.lt.s32.totalorder %s256, 1
          %s258 = scalar_select %p257, %s256, 1
          %s259 = scalar_lea.vmem %s1, %s258
          %s260 = sadd.s32 %s19, %s20
        $region58: #{custom_loss.1} parent=15 // pred_fallthru
          _
      $region16: #{custom_loss.1} parent=5 // pred_fallthru
        _
      %p261 = scmp.le.s32.totalorder 1, %s12
      %p262 = scmp.lt.s32.totalorder %s12, 3
      %p263 = pnand %p261, %p262
      %p264 = pneg %p263
      // Predicated region
      $region59: #{custom_loss.1} parent=5 // pred_check
        _
      $region60: #{custom_loss.1} parent=5 // pred_check_branch
        %266 = sbr.rel (%p263) target = $region62
      $region61: #{custom_loss.1} parent=5 // pred_region
        %s267 = ssub.s32 %s12, 1
        %s268 = sand.u32 %s39, 1
        %s269 = sand.u32 %s39, 1
        %s270 = smul.addr %s269, 24
        %s271 = scalar_lea.vmem [#allocation6], %s270
        // Predicated region
        $region63: #{custom_loss.1} parent=61 // pred_check
          %p272 = pneg %p52
        $region64: #{custom_loss.1} parent=61 // pred_check_branch
          %274 = sbr.rel (%p272) target = $region66
        $region65: #{custom_loss.1} parent=61 // pred_region
          _
        $region66: #{custom_loss.1} parent=61 // pred_fallthru
          _
        %s275 = sand.u32 %s39, 1
        %s276 = sand.u32 %s39, 1
        %s277 = smul.addr %s276, 24
        %s278 = scalar_lea.vmem [#allocation6], %s277
        %p279 = pneg %p52
        %p280 = pneg %p49
        %s281 = sadd.s32 %s21, %s22
        %p282 = scmp.lt.s32.totalorder %s281, 1
        %s283 = scalar_select %p282, %s281, 1
        %s284 = scalar_lea.vmem %s1, %s283
        %p285 = pneg %p80
        %p286 = pneg %p77
        %p287 = pneg %p106
        %p288 = pneg %p103
        %p289 = scmp.lt.s32.totalorder %s21, 1
        %s290 = scalar_select %p289, %s21, 1
        %s291 = smul.addr %s290, 3
        %s292 = smul.addr %s291, 8
        %s293 = scalar_lea.vmem %s2, %s292
        %p294 = pneg %p132
        %p295 = pneg %p129
        %p296 = scmp.lt.s32.totalorder %s21, 1
        %s297 = scalar_select %p296, %s21, 1
        %s298 = smul.addr %s297, 3
        %s299 = smul.addr %s298, 8
        %s300 = scalar_lea.vmem %s3, %s299
        %p301 = pneg %p158
        %p302 = pneg %p155
        %p303 = scmp.lt.s32.totalorder %s21, 1
        %s304 = scalar_select %p303, %s21, 1
        %s305 = smul.addr %s304, 3
        %s306 = smul.addr %s305, 8
        %s307 = scalar_lea.vmem %s4, %s306
        %p308 = pneg %p184
        %p309 = pneg %p181
        %p310 = scmp.lt.s32.totalorder %s21, 1
        %s311 = scalar_select %p310, %s21, 1
        %s312 = scalar_lea.vmem %s5, %s311
        %s313 = sadd.s32 %s21, %s22
        %s314 = sadd.s32 %s21, %s22
        %p315 = scmp.lt.s32.totalorder %s314, 1
        %s316 = scalar_select %p315, %s314, 1
        %s317 = scalar_lea.vmem %s1, %s316
        %s318 = sadd.s32 %s21, %s22
        %p319 = scmp.lt.s32.totalorder %s21, 1
        %s320 = scalar_select %p319, %s21, 1
        %s321 = smul.addr %s320, 3
        %s322 = smul.addr %s321, 8
        %s323 = scalar_lea.vmem %s2, %s322
        %p324 = scmp.lt.s32.totalorder %s21, 1
        %s325 = scalar_select %p324, %s21, 1
        %s326 = smul.addr %s325, 3
        %s327 = smul.addr %s326, 8
        %s328 = scalar_lea.vmem %s3, %s327
        %p329 = scmp.lt.s32.totalorder %s21, 1
        %s330 = scalar_select %p329, %s21, 1
        %s331 = smul.addr %s330, 3
        %s332 = smul.addr %s331, 8
        %s333 = scalar_lea.vmem %s4, %s332
        %p334 = scmp.lt.s32.totalorder %s21, 1
        %s335 = scalar_select %p334, %s21, 1
        %s336 = scalar_lea.vmem %s5, %s335
        %p337 = scmp.eq.s32.totalorder %s22, 0
        // Predicated region
        $region67: #{custom_loss.1} parent=61 // pred_check
          %p338 = pneg %p337
        $region68: #{custom_loss.1} parent=61 // pred_check_branch
          %340 = sbr.rel (%p338) target = $region70
        $region69: #{custom_loss.1} parent=61 // pred_region
          %vm341 = vcmask 7168
          %342 = vst.msk [vmem:[#allocation2] sm:$0xff] %vm341, 0.0
          %343 = vst.msk [vmem:[#allocation2 + $0x8] sm:$0xff] %vm341, 0.0
          %vm344 = vcmask 1024
          %345 = vst.msk [vmem:[#allocation2 + $0x10] sm:$0x3] %vm344, 0.0
          %346 = vst.msk [vmem:[#allocation3] sm:$0xff] %vm341, 0.0
          %347 = vst.msk [vmem:[#allocation3 + $0x8] sm:$0xff] %vm341, 0.0
          %348 = vst.msk [vmem:[#allocation3 + $0x10] sm:$0x3] %vm344, 0.0
          %349 = vst.msk [vmem:[#allocation4] sm:$0xff] %vm341, 0.0
          %350 = vst.msk [vmem:[#allocation4 + $0x8] sm:$0xff] %vm341, 0.0
          %351 = vst.msk [vmem:[#allocation4 + $0x10] sm:$0x3] %vm344, 0.0
          %vm352 = vcmask 0
          %353 = vst.msk [vmem:[#allocation5] sm:$0x1] %vm352, 0.0
        $region70: #{custom_loss.1} parent=61 // pred_fallthru
          _
        %v354 = vld [vmem:[%s271] sm:$0xff]
        %v355 = vld [vmem:[%s271 + $0x8] sm:$0xff]
        %v356 = vld [vmem:[%s271 + $0x10] sm:$0x3]
        %v357 = vld [vmem:[%s317] sm:$0x1]
        %v358 = vlaneseq
        %v359 = vshrl.u32 %v358, 7
        %v360 = vadd.s32 %v359, 8
        %v361 = vadd.s32 %v359, 16
        %v362 = vlaneseq
        %v363 = vshrl.u32 %v362, 7
        %v364 = vsub.s32 0, %v363
        %v365 = vrot.slane %v357, %v364
        %vm366 = vcmp.eq.s32.totalorder %v359, %v365
        %vm367 = vcmp.eq.s32.totalorder %v360, %v365
        %vm368 = vcmp.eq.s32.totalorder %v361, %v365
        %v369 = vsel %vm366, 1, 0
        %v370 = vsel %vm367, 1, 0
        %v371 = vsel %vm368, 1, 0
        %v372 = vcvt.s32.f32 %v369
        %v373 = vcvt.s32.f32 %v370
        %v374 = vcvt.s32.f32 %v371
        %vm375 = vcmask 1041408
        %v376 = vsel %vm375, %v356, -inf
        %v377 = vmax.f32 %v354, %v355
        %v378 = vmax.f32 %v377, %v376
        %v379 = vrot.slane %v378, 4
        %v380 = vmax.f32 %v378, %v379
        %v381 = vrot.slane %v380, 2
        %v382 = vmax.f32 %v380, %v381
        %v383 = vrot.slane %v382, 1
        %v384 = vmax.f32 %v382, %v383
        %v385 = vsub.f32 %v354, %v384
        %v386 = vsub.f32 %v355, %v384
        %v387 = vsub.f32 %v356, %v384
        %v388 = vmul.f32 %v385, 1.442695
        %v389 = vpow.pop %v388
        %v390 = vmul.f32 %v386, 1.442695
        %v391 = vpow.pop %v390
        %v392 = vmul.f32 %v387, 1.442695
        %v393 = vpow.pop %v392
        %v394 = vadd.f32 %v389, %v391
        %v395 = vsel %vm375, %v393, 0.0
        %v396 = vadd.f32 %v394, %v395
        %v397 = vrot.slane %v396, 4
        %v398 = vadd.f32 %v396, %v397
        %v399 = vrot.slane %v398, 2
        %v400 = vadd.f32 %v398, %v399
        %v401 = vrot.slane %v400, 1
        %v402 = vadd.f32 %v400, %v401
        %v403 = vrcp.pop %v402
        %v404 = vmul.f32 %v402, %v403
        %v405 = vsub.f32 2.0, %v404
        %v406 = vmul.f32 %v403, %v405
        %v407 = vmul.f32 %v389, %v406
        %v408 = vmul.f32 %v391, %v406
        %v409 = vmul.f32 %v393, %v406
        %v410 = vlog2.pop %v402
        %v411 = vmul.f32 %v410, 0.6931472
        %v412 = vmul.f32 %v372, %v385
        %v413 = vmul.f32 %v373, %v386
        %v414 = vmul.f32 %v374, %v387
        %v415 = vadd.f32 %v412, %v413
        %v416 = vsel %vm375, %v414, 0.0
        %v417 = vadd.f32 %v415, %v416
        %v418 = vrot.slane %v417, 4
        %v419 = vadd.f32 %v417, %v418
        %v420 = vrot.slane %v419, 2
        %v421 = vadd.f32 %v419, %v420
        %v422 = vrot.slane %v421, 1
        %v423 = vadd.f32 %v421, %v422
        %v424 = vsub.f32 %v411, %v423
        %v425 = vld [vmem:[#allocation2] sm:$0xff]
        %v426 = vld [vmem:[#allocation2 + $0x8] sm:$0xff]
        %v427 = vld [vmem:[#allocation2 + $0x10] sm:$0x3]
        %v428 = vmul.f32 %v372, %v407
        %v429 = vmul.f32 %v373, %v408
        %v430 = vmul.f32 %v374, %v409
        %431 = vadd.xlane.f32.xlu0 %v428
        %v432 = vpop.xlane.xlu0 %431
        %433 = vadd.xlane.f32.xlu0 %v429
        %v434 = vpop.xlane.xlu0 %433
        %v435 = vsel %vm375, %v430, 0.0
        %436 = vadd.xlane.f32.xlu0 %v435
        %v437 = vpop.xlane.xlu0 %436
        %v438 = vadd.f32 %v425, %v432
        %v439 = vadd.f32 %v426, %v434
        %v440 = vadd.f32 %v427, %v437
        %vm441 = vcmask 7168
        %442 = vst.msk [vmem:[#allocation2] sm:$0xff] %vm441, %v438
        %443 = vst.msk [vmem:[#allocation2 + $0x8] sm:$0xff] %vm441, %v439
        %vm444 = vcmask 1024
        %445 = vst.msk [vmem:[#allocation2 + $0x10] sm:$0x3] %vm444, %v440
        %v446 = vld [vmem:[#allocation3] sm:$0xff]
        %v447 = vld [vmem:[#allocation3 + $0x8] sm:$0xff]
        %v448 = vld [vmem:[#allocation3 + $0x10] sm:$0x3]
        %449 = vadd.xlane.f32.xlu0 %v407
        %v450 = vpop.xlane.xlu0 %449
        %451 = vadd.xlane.f32.xlu0 %v408
        %v452 = vpop.xlane.xlu0 %451
        %v453 = vsel %vm375, %v409, 0.0
        %454 = vadd.xlane.f32.xlu0 %v453
        %v455 = vpop.xlane.xlu0 %454
        %v456 = vadd.f32 %v446, %v450
        %v457 = vadd.f32 %v447, %v452
        %v458 = vadd.f32 %v448, %v455
        %459 = vst.msk [vmem:[#allocation3] sm:$0xff] %vm441, %v456
        %460 = vst.msk [vmem:[#allocation3 + $0x8] sm:$0xff] %vm441, %v457
        %461 = vst.msk [vmem:[#allocation3 + $0x10] sm:$0x3] %vm444, %v458
        %v462 = vld [vmem:[#allocation4] sm:$0xff]
        %v463 = vld [vmem:[#allocation4 + $0x8] sm:$0xff]
        %v464 = vld [vmem:[#allocation4 + $0x10] sm:$0x3]
        %465 = vadd.xlane.f32.xlu0 %v372
        %v466 = vpop.xlane.xlu0 %465
        %467 = vadd.xlane.f32.xlu0 %v373
        %v468 = vpop.xlane.xlu0 %467
        %v469 = vsel %vm375, %v374, 0.0
        %470 = vadd.xlane.f32.xlu0 %v469
        %v471 = vpop.xlane.xlu0 %470
        %v472 = vadd.f32 %v462, %v466
        %v473 = vadd.f32 %v463, %v468
        %v474 = vadd.f32 %v464, %v471
        %475 = vst.msk [vmem:[#allocation4] sm:$0xff] %vm441, %v472
        %476 = vst.msk [vmem:[#allocation4 + $0x8] sm:$0xff] %vm441, %v473
        %477 = vst.msk [vmem:[#allocation4 + $0x10] sm:$0x3] %vm444, %v474
        %v478 = vld [vmem:[#allocation5] sm:$0x1]
        %479 = vadd.xlane.f32.xlu0 %v424
        %v480 = vpop.xlane.xlu0 %479
        %v481 = vadd.f32 %v478, %v480
        %vm482 = vcmask 0
        %483 = vst.msk [vmem:[#allocation5] sm:$0x1] %vm482, %v481
        // Predicated region
        $region71: #{custom_loss.1} parent=61 // pred_check
          %p484 = pneg %p337
        $region72: #{custom_loss.1} parent=61 // pred_check_branch
          %486 = sbr.rel (%p484) target = $region74
        $region73: #{custom_loss.1} parent=61 // pred_region
          %v487 = vld [vmem:[#allocation2] sm:$0xff]
          %v488 = vld [vmem:[#allocation2 + $0x8] sm:$0xff]
          %v489 = vld [vmem:[#allocation2 + $0x10] sm:$0x3]
          %490 = vst.msk [vmem:[%s323] sm:$0xff] %vm441, %v487
          %491 = vst.msk [vmem:[%s323 + $0x8] sm:$0xff] %vm441, %v488
          %492 = vst.msk [vmem:[%s323 + $0x10] sm:$0x3] %vm444, %v489
          %v493 = vld [vmem:[#allocation3] sm:$0xff]
          %v494 = vld [vmem:[#allocation3 + $0x8] sm:$0xff]
          %v495 = vld [vmem:[#allocation3 + $0x10] sm:$0x3]
          %496 = vst.msk [vmem:[%s328] sm:$0xff] %vm441, %v493
          %497 = vst.msk [vmem:[%s328 + $0x8] sm:$0xff] %vm441, %v494
          %498 = vst.msk [vmem:[%s328 + $0x10] sm:$0x3] %vm444, %v495
          %v499 = vld [vmem:[#allocation4] sm:$0xff]
          %v500 = vld [vmem:[#allocation4 + $0x8] sm:$0xff]
          %v501 = vld [vmem:[#allocation4 + $0x10] sm:$0x3]
          %502 = vst.msk [vmem:[%s333] sm:$0xff] %vm441, %v499
          %503 = vst.msk [vmem:[%s333 + $0x8] sm:$0xff] %vm441, %v500
          %504 = vst.msk [vmem:[%s333 + $0x10] sm:$0x3] %vm444, %v501
          %v505 = vld [vmem:[#allocation5] sm:$0x1]
          %506 = vst.msk [vmem:[%s336] sm:$0x1] %vm482, %v505
        $region74: #{custom_loss.1} parent=61 // pred_fallthru
          _
        %p507 = scmp.lt.s32.totalorder %s21, 1
        %s508 = scalar_select %p507, %s21, 1
        %s509 = smul.addr %s508, 3
        %s510 = smul.addr %s509, 8
        %s511 = scalar_lea.vmem %s2, %s510
        %p512 = scmp.lt.s32.totalorder %s21, 1
        %s513 = scalar_select %p512, %s21, 1
        %s514 = smul.addr %s513, 3
        %s515 = smul.addr %s514, 8
        %s516 = scalar_lea.vmem %s3, %s515
        %p517 = scmp.lt.s32.totalorder %s21, 1
        %s518 = scalar_select %p517, %s21, 1
        %s519 = smul.addr %s518, 3
        %s520 = smul.addr %s519, 8
        %s521 = scalar_lea.vmem %s4, %s520
        %p522 = scmp.lt.s32.totalorder %s21, 1
        %s523 = scalar_select %p522, %s21, 1
        %s524 = scalar_lea.vmem %s5, %s523
        // Predicated region
        $region75: #{custom_loss.1} parent=61 // pred_check
          %p525 = pneg %p103
        $region76: #{custom_loss.1} parent=61 // pred_check_branch
          %527 = sbr.rel (%p525) target = $region78
        $region77: #{custom_loss.1} parent=61 // pred_region
          _
        $region78: #{custom_loss.1} parent=61 // pred_fallthru
          _
        // Predicated region
        $region79: #{custom_loss.1} parent=61 // pred_check
          %p528 = pneg %p129
        $region80: #{custom_loss.1} parent=61 // pred_check_branch
          %530 = sbr.rel (%p528) target = $region82
        $region81: #{custom_loss.1} parent=61 // pred_region
          _
        $region82: #{custom_loss.1} parent=61 // pred_fallthru
          _
        // Predicated region
        $region83: #{custom_loss.1} parent=61 // pred_check
          %p531 = pneg %p155
        $region84: #{custom_loss.1} parent=61 // pred_check_branch
          %533 = sbr.rel (%p531) target = $region86
        $region85: #{custom_loss.1} parent=61 // pred_region
          _
        $region86: #{custom_loss.1} parent=61 // pred_fallthru
          _
        // Predicated region
        $region87: #{custom_loss.1} parent=61 // pred_check
          %p534 = pneg %p181
        $region88: #{custom_loss.1} parent=61 // pred_check_branch
          %536 = sbr.rel (%p534) target = $region90
        $region89: #{custom_loss.1} parent=61 // pred_region
          _
        $region90: #{custom_loss.1} parent=61 // pred_fallthru
          _
      $region62: #{custom_loss.1} parent=5 // pred_fallthru
        _
      %p537 = scmp.le.s32.totalorder 2, %s12
      // Predicated region
      $region91: #{custom_loss.1} parent=5 // pred_check
        %p538 = pneg %p537
      $region92: #{custom_loss.1} parent=5 // pred_check_branch
        %540 = sbr.rel (%p538) target = $region94
      $region93: #{custom_loss.1} parent=5 // pred_region
        %s541 = ssub.s32 %s12, 2
        // Predicated region
        $region95: #{custom_loss.1} parent=93 // pred_check
          %p542 = pneg %p109
        $region96: #{custom_loss.1} parent=93 // pred_check_branch
          %544 = sbr.rel (%p542) target = $region98
        $region97: #{custom_loss.1} parent=93 // pred_region
          %p545 = scmp.lt.s32.totalorder %s23, 1
          %s546 = scalar_select %p545, %s23, 1
          %s547 = smul.addr %s546, 3
          %s548 = smul.addr %s547, 8
          %s549 = scalar_lea.vmem %s2, %s548
        $region98: #{custom_loss.1} parent=93 // pred_fallthru
          _
        // Predicated region
        $region99: #{custom_loss.1} parent=93 // pred_check
          %p550 = pneg %p135
        $region100: #{custom_loss.1} parent=93 // pred_check_branch
          %552 = sbr.rel (%p550) target = $region102
        $region101: #{custom_loss.1} parent=93 // pred_region
          %p553 = scmp.lt.s32.totalorder %s23, 1
          %s554 = scalar_select %p553, %s23, 1
          %s555 = smul.addr %s554, 3
          %s556 = smul.addr %s555, 8
          %s557 = scalar_lea.vmem %s3, %s556
        $region102: #{custom_loss.1} parent=93 // pred_fallthru
          _
        // Predicated region
        $region103: #{custom_loss.1} parent=93 // pred_check
          %p558 = pneg %p161
        $region104: #{custom_loss.1} parent=93 // pred_check_branch
          %560 = sbr.rel (%p558) target = $region106
        $region105: #{custom_loss.1} parent=93 // pred_region
          %p561 = scmp.lt.s32.totalorder %s23, 1
          %s562 = scalar_select %p561, %s23, 1
          %s563 = smul.addr %s562, 3
          %s564 = smul.addr %s563, 8
          %s565 = scalar_lea.vmem %s4, %s564
        $region106: #{custom_loss.1} parent=93 // pred_fallthru
          _
        // Predicated region
        $region107: #{custom_loss.1} parent=93 // pred_check
          %p566 = pneg %p187
        $region108: #{custom_loss.1} parent=93 // pred_check_branch
          %568 = sbr.rel (%p566) target = $region110
        $region109: #{custom_loss.1} parent=93 // pred_region
          %p569 = scmp.lt.s32.totalorder %s23, 1
          %s570 = scalar_select %p569, %s23, 1
          %s571 = scalar_lea.vmem %s5, %s570
        $region110: #{custom_loss.1} parent=93 // pred_fallthru
          _
      $region94: #{custom_loss.1} parent=5 // pred_fallthru
        _
    $region6: #{custom_loss.1} parent=1 // loop_footer
      %s16 = sadd.s32 1, %s12
    $region7: #{custom_loss.1} parent=1 // loop_footer_branch
      %11 = sbr.rel target = $region3
    $region8: #{custom_loss.1} parent=1 // loop_exit
      _

</llo_original>
